<compile_context>
chip_gen: v5e
topology: v5e:2x2
jax: 0.10.0
libtpu: 0.0.40
codegen_flags: <defaults>
</compile_context>

<pallas_src>
import functools

import jax
import jax.numpy as jnp
from jax.experimental import pallas as pl
from jax.experimental.pallas import tpu as pltpu

EPS = 1e-5  # nn.LayerNorm default

# Per-grid-step VMEM budget (pipeline double buffers + in-kernel f32 temps).
# Small enough to fit v5e's 16 MiB scoped default even without the explicit
# vmem_limit_bytes, and v7x's tighter 64 MiB physical / 32 MiB scoped VMEM.
_VMEM_BLOCK_BUDGET_BYTES = 8 * 1024 * 1024
_MAX_ROW_TILE = 1024     # tile-size curve plateaus well below this
_MIN_GRID_STEPS = 8      # >= 2x pipeline depth per core with 2 TCs (v7x)


def _cond_ln_kernel(x_ref, c_ref, o_ref, *, d):
    # x_ref: (tm, D), c_ref: (tm, 2D), o_ref: (tm, D)
    x = x_ref[...].astype(jnp.float32)

    # Fused single-pass moments: var = E[x^2] - mean^2 (biased, like torch LN).
    inv_d = jnp.float32(1.0 / d)
    s1 = jnp.sum(x, axis=-1, keepdims=True)
    s2 = jnp.sum(x * x, axis=-1, keepdims=True)
    mean = s1 * inv_d
    var = jnp.maximum(s2 * inv_d - mean * mean, 0.0)
    inv = jax.lax.rsqrt(var + EPS)

    # Ref-level split of cond: two aligned loads, no (tm, 2D) live value.
    gamma = c_ref[:, :d].astype(jnp.float32)
    beta = c_ref[:, d:].astype(jnp.float32)

    o_ref[...] = ((x - mean) * inv * (1.0 + gamma) + beta).astype(o_ref.dtype)


def _pick_row_tile(n_rows, d, itemsize):
    """Row tile: sublane-aligned, VMEM-budgeted, capped, multi-step grid."""
    sub = 8 if itemsize >= 4 else (16 if itemsize == 2 else 32)

    # Per grid step live VMEM (upper bound):
    #   pipeline double buffers: 2 * (x + cond + out) = 8 * tm * D * itemsize
    #   in-kernel f32 temporaries (~4 arrays of (tm, D) f32): 16 * tm * D
    bytes_per_row = (8 * itemsize + 16) * d

    # Guard: at the minimum row tile we must still fit comfortably in VMEM.
    # TODO(synk): feature-split (two-pass) reduction for extremely large D.
    assert sub * bytes_per_row <= 24 * 1024 * 1024, (
        "CondLayerNorm: feature dim too large for single-block-per-row tiling")

    if n_rows <= sub:
        return n_rows  # full-extent block along rows is always legal

    tm = _VMEM_BLOCK_BUDGET_BYTES // bytes_per_row
    tm = min(tm, _MAX_ROW_TILE)
    # Force a multi-step grid so the pipeline overlaps and rows shard across
    # both TensorCores on v7x; the sublane multiple takes priority for tiny N.
    tm = min(tm, pl.cdiv(n_rows, _MIN_GRID_STEPS))
    tm = max(sub, (tm // sub) * sub)
    return min(tm, n_rows)


def cond_layer_norm(x, cond):
    """x: [B, T, D], cond: [B, T, 2D] -> [B, T, D]"""
    B, T, D = x.shape
    assert cond.shape == (B, T, 2 * D)

    N = B * T
    x2 = x.reshape(N, D)            # free row-major views, no HBM copies
    c2 = cond.reshape(N, 2 * D)

    itemsize = jnp.dtype(x.dtype).itemsize
    tm = _pick_row_tile(N, D, itemsize)
    grid = (pl.cdiv(N, tm),)        # partial last block is masked by Pallas

    kernel = functools.partial(_cond_ln_kernel, d=D)

    out = pl.pallas_call(
        kernel,
        out_shape=jax.ShapeDtypeStruct((N, D), x.dtype),
        grid_spec=pltpu.PrefetchScalarGridSpec(
            num_scalar_prefetch=0,
            grid=grid,
            in_specs=[
                pl.BlockSpec((tm, D), lambda i: (i, 0)),
                pl.BlockSpec((tm, 2 * D), lambda i: (i, 0)),
            ],
            out_specs=pl.BlockSpec((tm, D), lambda i: (i, 0)),
        ),
        compiler_params=pltpu.CompilerParams(
            dimension_semantics=("parallel",),      # rows shard across TCs
            vmem_limit_bytes=32 * 1024 * 1024,
        ),
        cost_estimate=pl.CostEstimate(
            flops=8 * N * D,
            transcendentals=N,                      # rsqrt per row
            bytes_accessed=4 * N * D * itemsize,    # x + cond(2x) + out
        ),
    )(x2, c2)

    return out.reshape(B, T, D)


def _reference(x, cond):
    D = x.shape[-1]
    gamma, beta = cond[..., :D], cond[..., D:]
    mean = jnp.mean(x, axis=-1, keepdims=True)
    var = jnp.mean((x - mean) ** 2, axis=-1, keepdims=True)
    x_norm = (x - mean) / jnp.sqrt(var + EPS)
    return x_norm * (1.0 + gamma) + beta


if __name__ == "__main__":
    key = jax.random.PRNGKey(0)
    k1, k2, k3, k4 = jax.random.split(key, 4)

    # Primary small-shape test.
    B, T, D = 2, 8, 32
    x = jax.random.normal(k1, (B, T, D), dtype=jnp.float32)
    cond = jax.random.normal(k2, (B, T, 2 * D), dtype=jnp.float32)

    out = cond_layer_norm(x, cond)
    out = jax.block_until_ready(out)

    ref = _reference(x, cond)
    assert out.shape == (B, T, D)
    assert jnp.allclose(out, ref, atol=1e-5, rtol=1e-5), "mismatch vs reference"

    # Ragged-row test: N = 26 rows, tm = 8 -> partial last block (masked).
    B2, T2, D2 = 2, 13, 48
    x_r = jax.random.normal(k3, (B2, T2, D2), dtype=jnp.float32)
    cond_r = jax.random.normal(k4, (B2, T2, 2 * D2), dtype=jnp.float32)
    out_r = jax.block_until_ready(cond_layer_norm(x_r, cond_r))
    ref_r = _reference(x_r, cond_r)
    assert jnp.allclose(out_r, ref_r, atol=1e-5, rtol=1e-5), "ragged mismatch"

    print("KERNEL_OK")
</pallas_src>

<mosaic_0001>
module attributes {stable_mosaic.version = 11 : i64} {
  func.func @_cond_ln_kernel(%arg0: i32, %arg1: memref<8x32xf32, #tpu.memory_space<vmem>>, %arg2: memref<8x64xf32, #tpu.memory_space<vmem>>, %arg3: memref<8x32xf32, #tpu.memory_space<vmem>>) attributes {dimension_semantics = [#tpu.dimension_semantics<parallel>], iteration_bounds = array<i64: 2>, scalar_prefetch = 0 : i64, scratch_operands = 0 : i64, tpu.core_type = #tpu.core_type<tc>, window_params = [{transform_indices = @transform_0, window_bounds = array<i64: 8, 32>}, {transform_indices = @transform_1, window_bounds = array<i64: 8, 64>}, {transform_indices = @transform_2, window_bounds = array<i64: 8, 32>}]} {
    %c0 = arith.constant 0 : index
    %c0_0 = arith.constant 0 : index
    %0 = vector.load %arg1[%c0, %c0_0] : memref<8x32xf32, #tpu.memory_space<vmem>>, vector<8x32xf32>
    %cst = arith.constant dense<0.000000e+00> : vector<8xf32>
    %1 = vector.multi_reduction <add>, %0, %cst [1] : vector<8x32xf32> to vector<8xf32>
    %2 = vector.shape_cast %1 : vector<8xf32> to vector<8x1xf32>
    %3 = arith.mulf %0, %0 : vector<8x32xf32>
    %cst_1 = arith.constant dense<0.000000e+00> : vector<8xf32>
    %4 = vector.multi_reduction <add>, %3, %cst_1 [1] : vector<8x32xf32> to vector<8xf32>
    %5 = vector.shape_cast %4 : vector<8xf32> to vector<8x1xf32>
    %cst_2 = arith.constant 3.125000e-02 : f32
    %6 = vector.broadcast %cst_2 : f32 to vector<8x1xf32>
    %7 = arith.mulf %2, %6 : vector<8x1xf32>
    %cst_3 = arith.constant 3.125000e-02 : f32
    %8 = vector.broadcast %cst_3 : f32 to vector<8x1xf32>
    %9 = arith.mulf %5, %8 : vector<8x1xf32>
    %10 = arith.mulf %7, %7 : vector<8x1xf32>
    %11 = arith.subf %9, %10 : vector<8x1xf32>
    %cst_4 = arith.constant 0.000000e+00 : f32
    %12 = vector.broadcast %cst_4 : f32 to vector<8x1xf32>
    %13 = arith.maximumf %11, %12 : vector<8x1xf32>
    %cst_5 = arith.constant 9.99999974E-6 : f32
    %14 = vector.broadcast %cst_5 : f32 to vector<8x1xf32>
    %15 = arith.addf %13, %14 : vector<8x1xf32>
    %16 = math.rsqrt %15 : vector<8x1xf32>
    %c0_6 = arith.constant 0 : index
    %c0_7 = arith.constant 0 : index
    %17 = vector.load %arg2[%c0_6, %c0_7] : memref<8x64xf32, #tpu.memory_space<vmem>>, vector<8x32xf32>
    %c0_8 = arith.constant 0 : index
    %c32 = arith.constant 32 : index
    %18 = vector.load %arg2[%c0_8, %c32] : memref<8x64xf32, #tpu.memory_space<vmem>>, vector<8x32xf32>
    %19 = vector.broadcast %7 : vector<8x1xf32> to vector<8x32xf32>
    %20 = arith.subf %0, %19 : vector<8x32xf32>
    %21 = vector.broadcast %16 : vector<8x1xf32> to vector<8x32xf32>
    %22 = arith.mulf %20, %21 : vector<8x32xf32>
    %cst_9 = arith.constant 1.000000e+00 : f32
    %23 = vector.broadcast %cst_9 : f32 to vector<8x32xf32>
    %24 = arith.addf %23, %17 : vector<8x32xf32>
    %25 = arith.mulf %22, %24 : vector<8x32xf32>
    %26 = arith.addf %25, %18 : vector<8x32xf32>
    %c0_10 = arith.constant 0 : index
    %c0_11 = arith.constant 0 : index
    %27 = vector.load %arg3[%c0_10, %c0_11] : memref<8x32xf32, #tpu.memory_space<vmem>>, vector<8x32xf32>
    tpu.vector_store %arg3[%c0_10, %c0_11], %26 {strides = array<i32>} : memref<8x32xf32, #tpu.memory_space<vmem>>, vector<8x32xf32>,
    return
  }
  func.func @transform_0(%arg0: i32) -> (i32, i32) {
    %c0_i32 = arith.constant 0 : i32
    %c0_i32_0 = arith.constant 0 : i32
    return %arg0, %c0_i32 : i32, i32
  }
  func.func @transform_1(%arg0: i32) -> (i32, i32) {
    %c0_i32 = arith.constant 0 : i32
    %c0_i32_0 = arith.constant 0 : i32
    return %arg0, %c0_i32 : i32, i32
  }
  func.func @transform_2(%arg0: i32) -> (i32, i32) {
    %c0_i32 = arith.constant 0 : i32
    %c0_i32_0 = arith.constant 0 : i32
    return %arg0, %c0_i32 : i32, i32
  }
}

</mosaic_0001>

<llo_original>
// kernel: tpu_custom_call.1
$region0: #{tpu_custom_call.1}
  #allocation0 [shape = 'u32[]', space=smem, size = 0x4, offset = 0x4, fixed_abs, tag = 'smem constant byte address 0x4 - core index']
  #allocation1 [shape = 'u32[72,128]{1,0:T(1,128)}', space=vmem, size = 0x9000, scoped, tag = 'internal scratch']
  %s0 = inlined_call_operand.hbm [shape: f32[16,32], index: 0, kind: input, shape index: {}]
  %s1 = inlined_call_operand.hbm [shape: f32[16,64], index: 1, kind: input, shape index: {}]
  %s2 = inlined_call_operand.hbm [shape: f32[16,32], index: 2, kind: output, shape index: {}]
  %s3 = sld [smem:[#allocation0]]
  $region49: #{tpu_custom_call.1} parent=0
    _
  %s5 = ssub.s32 1, %s3
  %s6 = scalar_select 0, %s5, %s3
  $region1: #{tpu_custom_call.1} parent=0
    #allocation2 [shape = 'u8[8192]{0}', space=vmem, size = 0x2000, scoped, tag = 'input window, operand 0']
    #allocation3 [shape = 's32[2]{0}', space=sflag, size = 0x8, scoped, tag = 'scoped memory for tpu_custom_call.1']
    #allocation4 [shape = 's32[2]{0}', space=sflag, size = 0x8, scoped, tag = 'scoped memory for tpu_custom_call.1']
    #allocation5 [shape = 'u8[8192]{0}', space=vmem, size = 0x2000, scoped, tag = 'input window, operand 1']
    #allocation6 [shape = 's32[2]{0}', space=sflag, size = 0x8, scoped, tag = 'scoped memory for tpu_custom_call.1']
    #allocation7 [shape = 'u8[8192]{0}', space=vmem, size = 0x2000, scoped, tag = 'output window, operand 0']
    %7 = vsyncpa [#allocation3], 0
    %s8 = scalar_lea.sflag [#allocation3], 1
    %9 = vsyncpa %s8, 0
    %10 = vsyncpa [#allocation6], 0
    %s11 = scalar_lea.sflag [#allocation6], 1
    %12 = vsyncpa %s11, 0
    %13 = vsyncpa [#allocation4], 0
    %s14 = scalar_lea.sflag [#allocation4], 1
    %15 = vsyncpa %s14, 0
    loop: start=0, step=1, limit=4
    $region2: #{tpu_custom_call.1} parent=1 // loop_pre_header
      _
    $region3: #{tpu_custom_call.1} parent=1 // loop_header
      %s17 = sphi 0, %s21
      %p18 = scmp.ge.s32.totalorder %s17, 4
      %s27 = sphi 0, %s29
      %s30 = sphi 0, %s27
      %s31 = sphi 0, %s30
      %s47 = sphi 0, %s31
      %s53 = sphi 0, %s55
      %s56 = sphi 0, %s53
      %s57 = sphi 0, %s56
      %s73 = sphi 0, %s57
      %s79 = sphi 0, %s81
      %s82 = sphi 0, %s79
      %s83 = sphi 0, %s82
      %s99 = sphi 0, %s83
    $region4: #{tpu_custom_call.1} parent=1 // loop_header_branch
      %20 = sbr.rel (%p18) target = $region8
    $region5: #{tpu_custom_call.1} parent=1 // loop_body
      %s22 = ssub.s32 %s17, 1
      %s23 = ssub.s32 %s17, 2
      %s24 = sadd.s32 %s17, 1
      %s25 = ssub.s32 %s17, %s24
      %p26 = scmp.eq.s32.totalorder %s25, 0
      %s28 = sadd.s32 %s27, 1
      %s29 = scalar_select %p26, %s27, %s28
      %p32 = pneg %p26
      %p33 = scmp.eq.s32.totalorder %s17, 1
      %p34 = por %p32, %p33
      %p35 = scmp.ne.s32.totalorder %s27, %s30
      %p36 = scmp.eq.s32.totalorder %s17, 0
      %p37 = por %p35, %p36
      %p38 = scmp.ne.s32.totalorder %s27, %s30
      %p39 = scmp.eq.s32.totalorder %s22, 1
      %p40 = por %p38, %p39
      %p41 = scmp.ne.s32.totalorder %s30, %s31
      %p42 = scmp.eq.s32.totalorder %s22, 0
      %p43 = por %p41, %p42
      %p44 = scmp.ne.s32.totalorder %s30, %s31
      %p45 = scmp.eq.s32.totalorder %s23, 1
      %p46 = por %p44, %p45
      %p48 = scmp.ne.s32.totalorder %s31, %s47
      %p49 = scmp.eq.s32.totalorder %s23, 0
      %p50 = por %p48, %p49
      %s51 = ssub.s32 %s17, %s24
      %p52 = scmp.eq.s32.totalorder %s51, 0
      %s54 = sadd.s32 %s53, 1
      %s55 = scalar_select %p52, %s53, %s54
      %p58 = pneg %p52
      %p59 = scmp.eq.s32.totalorder %s17, 1
      %p60 = por %p58, %p59
      %p61 = scmp.ne.s32.totalorder %s53, %s56
      %p62 = scmp.eq.s32.totalorder %s17, 0
      %p63 = por %p61, %p62
      %p64 = scmp.ne.s32.totalorder %s53, %s56
      %p65 = scmp.eq.s32.totalorder %s22, 1
      %p66 = por %p64, %p65
      %p67 = scmp.ne.s32.totalorder %s56, %s57
      %p68 = scmp.eq.s32.totalorder %s22, 0
      %p69 = por %p67, %p68
      %p70 = scmp.ne.s32.totalorder %s56, %s57
      %p71 = scmp.eq.s32.totalorder %s23, 1
      %p72 = por %p70, %p71
      %p74 = scmp.ne.s32.totalorder %s57, %s73
      %p75 = scmp.eq.s32.totalorder %s23, 0
      %p76 = por %p74, %p75
      %s77 = ssub.s32 %s17, %s24
      %p78 = scmp.eq.s32.totalorder %s77, 0
      %s80 = sadd.s32 %s79, 1
      %s81 = scalar_select %p78, %s79, %s80
      %p84 = pneg %p78
      %p85 = scmp.eq.s32.totalorder %s17, 1
      %p86 = por %p84, %p85
      %p87 = scmp.ne.s32.totalorder %s79, %s82
      %p88 = scmp.eq.s32.totalorder %s17, 0
      %p89 = por %p87, %p88
      %p90 = scmp.ne.s32.totalorder %s79, %s82
      %p91 = scmp.eq.s32.totalorder %s22, 1
      %p92 = por %p90, %p91
      %p93 = scmp.ne.s32.totalorder %s82, %s83
      %p94 = scmp.eq.s32.totalorder %s22, 0
      %p95 = por %p93, %p94
      %p96 = scmp.ne.s32.totalorder %s82, %s83
      %p97 = scmp.eq.s32.totalorder %s23, 1
      %p98 = por %p96, %p97
      %p100 = scmp.ne.s32.totalorder %s83, %s99
      %p101 = scmp.eq.s32.totalorder %s23, 0
      %p102 = por %p100, %p101
      %p103 = scmp.le.s32.totalorder 1, %s17
      %p104 = scmp.lt.s32.totalorder %s17, 3
      %p105 = pnand %p103, %p104
      %p106 = pneg %p105
      // Predicated region
      $region9: #{tpu_custom_call.1} parent=5 // pred_check
        _
      $region10: #{tpu_custom_call.1} parent=5 // pred_check_branch
        %108 = sbr.rel (%p105) target = $region12
      $region11: #{tpu_custom_call.1} parent=5 // pred_region
        %s109 = ssub.s32 %s17, 1
      $region12: #{tpu_custom_call.1} parent=5 // pred_fallthru
        _
      %p110 = scmp.lt.s32.totalorder %s17, 2
      // Predicated region
      $region13: #{tpu_custom_call.1} parent=5 // pred_check
        %p111 = pneg %p110
      $region14: #{tpu_custom_call.1} parent=5 // pred_check_branch
        %113 = sbr.rel (%p111) target = $region16
      $region15: #{tpu_custom_call.1} parent=5 // pred_region
        // Predicated region
        $region17: #{tpu_custom_call.1} parent=15 // pred_check
          %p114 = pneg %p37
        $region18: #{tpu_custom_call.1} parent=15 // pred_check_branch
          %116 = sbr.rel (%p114) target = $region20
        $region19: #{tpu_custom_call.1} parent=15 // pred_region
          %s117 = sand.u32 %s27, 1
          %s118 = scalar_lea.sflag [#allocation3], %s117
          %s119 = sand.u32 %s27, 1
          %s120 = smul.addr %s119, 8
          %s121 = scalar_lea.vmem [#allocation2], %s120
          %123 = vsyncadd %s118, 0
          %s124 = smul.addr %s17, 8
          %s125 = scalar_lea.hbm %s0, %s124
          %s127 = sshll.u32 %s125, 4
          %s128 = int_to_ptr.hbm [resolvable:$true] %s127
          %s129 = sshll.u32 %s121, 4
          %s130 = int_to_ptr.vmem [resolvable:$true] %s129
          %132 = dma.hbm_to_vmem [thread:$0]  %s128, 128, %s130, %s118
        $region20: #{tpu_custom_call.1} parent=15 // pred_fallthru
          _
        // Predicated region
        $region21: #{tpu_custom_call.1} parent=15 // pred_check
          %p133 = pneg %p63
        $region22: #{tpu_custom_call.1} parent=15 // pred_check_branch
          %135 = sbr.rel (%p133) target = $region24
        $region23: #{tpu_custom_call.1} parent=15 // pred_region
          %s136 = sand.u32 %s53, 1
          %s137 = scalar_lea.sflag [#allocation6], %s136
          %s138 = sand.u32 %s53, 1
          %s139 = smul.addr %s138, 8
          %s140 = scalar_lea.vmem [#allocation5], %s139
          %142 = vsyncadd %s137, 0
          %s143 = smul.addr %s17, 8
          %s144 = scalar_lea.hbm %s1, %s143
          %s146 = sshll.u32 %s144, 4
          %s147 = int_to_ptr.hbm [resolvable:$true] %s146
          %s148 = sshll.u32 %s140, 4
          %s149 = int_to_ptr.vmem [resolvable:$true] %s148
          %151 = dma.hbm_to_vmem [thread:$0]  %s147, 128, %s149, %s137
        $region24: #{tpu_custom_call.1} parent=15 // pred_fallthru
          _
      $region16: #{tpu_custom_call.1} parent=5 // pred_fallthru
        _
      %p152 = scmp.le.s32.totalorder 1, %s17
      %p153 = scmp.lt.s32.totalorder %s17, 3
      %p154 = pnand %p152, %p153
      %p155 = pneg %p154
      // Predicated region
      $region25: #{tpu_custom_call.1} parent=5 // pred_check
        _
      $region26: #{tpu_custom_call.1} parent=5 // pred_check_branch
        %157 = sbr.rel (%p154) target = $region28
      $region27: #{tpu_custom_call.1} parent=5 // pred_region
        %s158 = ssub.s32 %s17, 1
        %s159 = sand.u32 %s30, 1
        %s160 = scalar_lea.sflag [#allocation3], %s159
        %s161 = sand.u32 %s30, 1
        %s162 = smul.addr %s161, 8
        %s163 = scalar_lea.vmem [#allocation2], %s162
        // Predicated region
        $region29: #{tpu_custom_call.1} parent=27 // pred_check
          %p164 = pneg %p43
        $region30: #{tpu_custom_call.1} parent=27 // pred_check_branch
          %166 = sbr.rel (%p164) target = $region32
        $region31: #{tpu_custom_call.1} parent=27 // pred_region
          %168 = dma.done %s160, 128
        $region32: #{tpu_custom_call.1} parent=27 // pred_fallthru
          _
        %s169 = sand.u32 %s56, 1
        %s170 = scalar_lea.sflag [#allocation6], %s169
        %s171 = sand.u32 %s56, 1
        %s172 = smul.addr %s171, 8
        %s173 = scalar_lea.vmem [#allocation5], %s172
        // Predicated region
        $region33: #{tpu_custom_call.1} parent=27 // pred_check
          %p174 = pneg %p69
        $region34: #{tpu_custom_call.1} parent=27 // pred_check_branch
          %176 = sbr.rel (%p174) target = $region36
        $region35: #{tpu_custom_call.1} parent=27 // pred_region
          %178 = dma.done %s170, 128
        $region36: #{tpu_custom_call.1} parent=27 // pred_fallthru
          _
        %s179 = sand.u32 %s30, 1
        %s180 = scalar_lea.sflag [#allocation3], %s179
        %s181 = sand.u32 %s30, 1
        %s182 = smul.addr %s181, 8
        %s183 = scalar_lea.vmem [#allocation2], %s182
        %p184 = pneg %p43
        %p185 = pneg %p40
        %s186 = sand.u32 %s56, 1
        %s187 = scalar_lea.sflag [#allocation6], %s186
        %s188 = sand.u32 %s56, 1
        %s189 = smul.addr %s188, 8
        %s190 = scalar_lea.vmem [#allocation5], %s189
        %p191 = pneg %p69
        %p192 = pneg %p66
        %p193 = pneg %p95
        %p194 = pneg %p92
        %s195 = sand.u32 %s82, 1
        %s196 = scalar_lea.sflag [#allocation4], %s195
        %s197 = sand.u32 %s82, 1
        %s198 = smul.addr %s197, 8
        %s199 = scalar_lea.vmem [#allocation7], %s198
        %v200 = vld [vmem:[%s163] sm:$0xff]
        %vm201 = vcmask 261120
        %v202 = vsel %vm201, %v200, 0.0
        %203 = vadd.xlane.f32.xlu0 %v202
        %v204 = vpop.xlane.xlu0 %203
        %v205 = vmul.f32 %v200, %v200
        %v206 = vsel %vm201, %v205, 0.0
        %207 = vadd.xlane.f32.xlu0 %v206
        %v208 = vpop.xlane.xlu0 %207
        %v209 = vmul.f32 %v204, 0.03125
        %v210 = vmul.f32 %v208, 0.03125
        %v211 = vmul.f32 %v209, %v209
        %v212 = vsub.f32 %v210, %v211
        %v213 = vmax.f32 %v212, 0.0
        %v214 = vadd.f32 %v213, 1e-05
        %v215 = vrsqrt.pop %v214
        %v216 = vmul.f32 %v215, %v214
        %v217 = vmul.f32 %v216, %v215
        %v218 = vmul.f32 0.5, %v217
        %v219 = vsub.f32 1.5, %v218
        %v220 = vmul.f32 %v215, %v219
        %vm221 = vweird.f32 %v214
        %vm222 = vweird.f32 %v215
        %vm223 = vmor %vm221, %vm222
        %v224 = vsel %vm223, %v215, %v220
        %v225 = vld [vmem:[%s173] sm:$0xff]
        %v226 = vsub.f32 %v200, %v209
        %v227 = vmul.f32 %v226, %v224
        %v228 = vadd.f32 %v225, 1.0
        %v229 = vmul.f32 %v227, %v228
        %231 = vrot.lane.b32.xlu0 %v225, 96
        %v232 = vpop.permute.xlu0 %231
        %v234 = vadd.f32 %v229, %v232
        %235 = vst.msk [vmem:[%s199] sm:$0xff] %vm201, %v234
        %s236 = sand.u32 %s82, 1
        %s237 = scalar_lea.sflag [#allocation4], %s236
        %s238 = sand.u32 %s82, 1
        %s239 = smul.addr %s238, 8
        %s240 = scalar_lea.vmem [#allocation7], %s239
        // Predicated region
        $region37: #{tpu_custom_call.1} parent=27 // pred_check
          %p241 = pneg %p92
        $region38: #{tpu_custom_call.1} parent=27 // pred_check_branch
          %243 = sbr.rel (%p241) target = $region40
        $region39: #{tpu_custom_call.1} parent=27 // pred_region
          %245 = vsyncadd %s237, 0
          %s246 = smul.addr %s22, 8
          %s247 = scalar_lea.hbm %s2, %s246
          %s249 = sshll.u32 %s240, 4
          %s250 = int_to_ptr.vmem [resolvable:$true] %s249
          %s251 = sshll.u32 %s247, 4
          %s252 = int_to_ptr.hbm [resolvable:$true] %s251
          %254 = dma.vmem_to_hbm [thread:$0]  %s250, 128, %s252, %s237
        $region40: #{tpu_custom_call.1} parent=27 // pred_fallthru
          _
      $region28: #{tpu_custom_call.1} parent=5 // pred_fallthru
        _
      %p255 = scmp.le.s32.totalorder 2, %s17
      // Predicated region
      $region41: #{tpu_custom_call.1} parent=5 // pred_check
        %p256 = pneg %p255
      $region42: #{tpu_custom_call.1} parent=5 // pred_check_branch
        %258 = sbr.rel (%p256) target = $region44
      $region43: #{tpu_custom_call.1} parent=5 // pred_region
        %s259 = ssub.s32 %s17, 2
        // Predicated region
        $region45: #{tpu_custom_call.1} parent=43 // pred_check
          %p260 = pneg %p98
        $region46: #{tpu_custom_call.1} parent=43 // pred_check_branch
          %262 = sbr.rel (%p260) target = $region48
        $region47: #{tpu_custom_call.1} parent=43 // pred_region
          %s263 = sand.u32 %s83, 1
          %s264 = scalar_lea.sflag [#allocation4], %s263
          %s265 = sand.u32 %s83, 1
          %s266 = smul.addr %s265, 8
          %s267 = scalar_lea.vmem [#allocation7], %s266
          %269 = dma.done %s264, 128
        $region48: #{tpu_custom_call.1} parent=43 // pred_fallthru
          _
      $region44: #{tpu_custom_call.1} parent=5 // pred_fallthru
        _
    $region6: #{tpu_custom_call.1} parent=1 // loop_footer
      %s21 = sadd.s32 1, %s17
    $region7: #{tpu_custom_call.1} parent=1 // loop_footer_branch
      %16 = sbr.rel target = $region3
    $region8: #{tpu_custom_call.1} parent=1 // loop_exit
      _
    %270 = vsyncpa [#allocation3], 1
    %s271 = scalar_lea.sflag [#allocation3], 1
    %272 = vsyncpa %s271, 1
    %273 = vsyncpa [#allocation6], 1
    %s274 = scalar_lea.sflag [#allocation6], 1
    %275 = vsyncpa %s274, 1
    %276 = vsyncpa [#allocation4], 1
    %s277 = scalar_lea.sflag [#allocation4], 1
    %278 = vsyncpa %s277, 1

</llo_original>
